<compile_context>
chip_gen: v6e
topology: v6e:2x2x1
jax: 0.10.0
libtpu: 0.0.40
codegen_flags: <defaults>
</compile_context>

<pallas_src>
import math

import jax
import jax.numpy as jnp
from jax import lax
from jax.experimental import pallas as pl
from jax.experimental.pallas import tpu as pltpu


def _round_up(x, m):
    return ((x + m - 1) // m) * m


def _fake_quant(t, quant_min, quant_max, eps=1e-8):
    """Dynamic min/max fake-quantize + dequantize (mirrors the PyTorch module).

    Zero-range tensors (e.g. the documented all-zeros lora_B init) safely
    dequantize to exactly 0 via the eps path.
    """
    t = t.astype(jnp.float32)
    t_min = jnp.min(t)
    t_max = jnp.max(t)
    scale = (t_max - t_min) / jnp.float32(quant_max - quant_min)
    zp = jnp.float32(quant_min) - t_min / (scale + eps)
    q = jnp.clip(jnp.round(t / (scale + eps) + zp),
                 jnp.float32(quant_min), jnp.float32(quant_max))
    return (q - zp) * scale


def _qlora_kernel(x_ref, a_ref, b_ref, o_ref):
    """One row-tile of out = (x @ dq_A^T) @ (scaling * dq_B)^T."""
    x = x_ref[...]            # (TILE_N, in_features)     compute dtype
    a = a_ref[...]            # (rank_p, in_features)     compute dtype
    b = b_ref[...]            # (out_features, rank_p)    compute dtype, pre-scaled

    # h = x @ A^T  -- contract last dims (NT form), accumulate in f32.
    h = lax.dot_general(x, a, (((1,), (1,)), ((), ())),
                        preferred_element_type=jnp.float32)
    h = h.astype(b.dtype)

    # out = h @ (scaling*B)^T  -- contract last dims, accumulate in f32.
    out = lax.dot_general(h, b, (((1,), (1,)), ((), ())),
                          preferred_element_type=jnp.float32)
    o_ref[...] = out.astype(o_ref.dtype)


def qlora_forward(x, lora_A, lora_B, *, alpha=1.0, quantization_bits=4,
                  compute_dtype=jnp.bfloat16, tile_n=512):
    """QLoRA forward. x: [..., in_features] -> [..., out_features]."""
    rank, in_features = lora_A.shape
    out_features = lora_B.shape[0]
    scaling = alpha / rank
    quant_min = -(2 ** (quantization_bits - 1)) + 1
    quant_max = 2 ** (quantization_bits - 1) - 1

    # ---- hoisted (done once, not per grid step): fake-quant + scaling fold ----
    dq_a = _fake_quant(lora_A, quant_min, quant_max)                     # (rank, in)
    dq_b = _fake_quant(lora_B, quant_min, quant_max) * jnp.float32(scaling)  # (out, rank)

    # Zero-pad rank to a multiple of 8 sublanes (padding has no effect on result).
    rank_p = _round_up(rank, 8)
    if rank_p != rank:
        dq_a = jnp.pad(dq_a, ((0, rank_p - rank), (0, 0)))
        dq_b = jnp.pad(dq_b, ((0, 0), (0, rank_p - rank)))
    dq_a = dq_a.astype(compute_dtype)
    dq_b = dq_b.astype(compute_dtype)

    # ---- flatten leading dims to a row axis and tile it ----
    lead = x.shape[:-1]
    n = math.prod(lead) if lead else 1
    x2d = x.reshape(n, in_features).astype(compute_dtype)

    tn = min(tile_n, _round_up(n, 8))
    num_tiles = pl.cdiv(n, tn)
    n_pad = num_tiles * tn
    if n_pad != n:
        x2d = jnp.pad(x2d, ((0, n_pad - n), (0, 0)))

    in_itemsize = jnp.dtype(compute_dtype).itemsize
    out_itemsize = jnp.dtype(x.dtype).itemsize
    param_bytes = (rank_p * in_features + out_features * rank_p) * in_itemsize
    # Double-buffered x/out tiles + resident LoRA factors + headroom,
    # capped below v7x's 64 MiB physical VMEM.
    vmem_limit = int(min(
        64 << 20,
        max(16 << 20,
            2 * tn * (in_features * in_itemsize + out_features * out_itemsize)
            + param_bytes + (4 << 20))))

    cost = pl.CostEstimate(
        flops=2 * n_pad * rank_p * (in_features + out_features),
        transcendentals=0,
        bytes_accessed=(n_pad * in_features * in_itemsize
                        + n_pad * out_features * out_itemsize
                        + param_bytes),
    )

    out2d = pl.pallas_call(
        _qlora_kernel,
        out_shape=jax.ShapeDtypeStruct((n_pad, out_features), x.dtype),
        grid=(num_tiles,),
        in_specs=[
            pl.BlockSpec((tn, in_features), lambda i: (i, 0)),
            pl.BlockSpec((rank_p, in_features), lambda i: (0, 0)),
            pl.BlockSpec((out_features, rank_p), lambda i: (0, 0)),
        ],
        out_specs=pl.BlockSpec((tn, out_features), lambda i: (i, 0)),
        compiler_params=pltpu.CompilerParams(
            dimension_semantics=("parallel",),
            vmem_limit_bytes=vmem_limit,
        ),
        cost_estimate=cost,
    )(x2d, dq_a, dq_b)

    out2d = out2d[:n]
    # TODO(synk): dropout is nn.Identity for the default dropout=0.0; a real
    # dropout>0 path would need pltpu.prng_* inside the kernel.
    return out2d.reshape(*lead, out_features)


def qlora_reference(x, lora_A, lora_B, *, alpha=1.0, quantization_bits=4):
    """Pure-JAX f32 reference mirroring the PyTorch forward (materializes W)."""
    rank = lora_A.shape[0]
    scaling = alpha / rank
    quant_min = -(2 ** (quantization_bits - 1)) + 1
    quant_max = 2 ** (quantization_bits - 1) - 1
    dq_a = _fake_quant(lora_A, quant_min, quant_max)
    dq_b = _fake_quant(lora_B, quant_min, quant_max)
    w = dq_b @ dq_a
    return (x.astype(jnp.float32) @ w.T) * jnp.float32(scaling)


def _rel_err(out, ref):
    out = out.astype(jnp.float32)
    ref = ref.astype(jnp.float32)
    return float(jnp.max(jnp.abs(out - ref)) / (jnp.max(jnp.abs(ref)) + 1e-12))


if __name__ == "__main__":
    key = jax.random.PRNGKey(0)
    k_x, k_a, k_b = jax.random.split(key, 3)

    batch, seq = 2, 8
    in_features, out_features, rank = 32, 64, 4
    alpha, qbits = 1.0, 4

    x = jax.random.normal(k_x, (batch, seq, in_features), dtype=jnp.float32)
    # Module __init__: lora_A = randn(rank, in) * 0.1 ; lora_B = zeros(out, rank)
    lora_A = jax.random.normal(k_a, (rank, in_features), dtype=jnp.float32) * 0.1
    lora_B0 = jnp.zeros((out_features, rank), dtype=jnp.float32)

    # 1) Documented zero init of lora_B -> output must be exactly zero.
    out0 = jax.block_until_ready(
        qlora_forward(x, lora_A, lora_B0, alpha=alpha, quantization_bits=qbits))
    ref0 = qlora_reference(x, lora_A, lora_B0, alpha=alpha, quantization_bits=qbits)
    assert out0.shape == (batch, seq, out_features), out0.shape
    assert jnp.allclose(out0, ref0, atol=1e-6), "mismatch (zero-init lora_B)"

    # 2) Non-zero lora_B exercises the full math path.
    lora_B = jax.random.normal(k_b, (out_features, rank), dtype=jnp.float32) * 0.1
    ref = qlora_reference(x, lora_A, lora_B, alpha=alpha, quantization_bits=qbits)

    # f32 MXU-input path: tight-ish tolerance (different accumulation order
    # vs the materialized-W reference).
    out_f32 = jax.block_until_ready(
        qlora_forward(x, lora_A, lora_B, alpha=alpha, quantization_bits=qbits,
                      compute_dtype=jnp.float32))
    assert out_f32.shape == (batch, seq, out_features), out_f32.shape
    assert _rel_err(out_f32, ref) < 2e-2, "mismatch vs reference (f32 path)"

    # Default bf16 MXU-input path (f32 accumulation): looser tolerance.
    out_bf16 = jax.block_until_ready(
        qlora_forward(x, lora_A, lora_B, alpha=alpha, quantization_bits=qbits))
    assert out_bf16.shape == (batch, seq, out_features), out_bf16.shape
    assert _rel_err(out_bf16, ref) < 5e-2, "mismatch vs reference (bf16 path)"

    print("KERNEL_OK")
</pallas_src>

<mosaic_0001>
module attributes {stable_mosaic.version = 11 : i64} {
  func.func @_qlora_kernel(%arg0: i32, %arg1: memref<16x32xbf16, #tpu.memory_space<vmem>>, %arg2: memref<8x32xbf16, #tpu.memory_space<vmem>>, %arg3: memref<64x8xbf16, #tpu.memory_space<vmem>>, %arg4: memref<16x64xf32, #tpu.memory_space<vmem>>) attributes {dimension_semantics = [#tpu.dimension_semantics<parallel>], iteration_bounds = array<i64: 1>, scalar_prefetch = 0 : i64, scratch_operands = 0 : i64, tpu.core_type = #tpu.core_type<tc>, window_params = [{transform_indices = @transform_0, window_bounds = array<i64: 16, 32>}, {pipeline_mode = #tpu.pipeline_mode<synchronous>, transform_indices = @transform_1, window_bounds = array<i64: 8, 32>}, {pipeline_mode = #tpu.pipeline_mode<synchronous>, transform_indices = @transform_2, window_bounds = array<i64: 64, 8>}, {transform_indices = @transform_3, window_bounds = array<i64: 16, 64>}]} {
    %c0 = arith.constant 0 : index
    %c0_0 = arith.constant 0 : index
    %0 = vector.load %arg1[%c0, %c0_0] : memref<16x32xbf16, #tpu.memory_space<vmem>>, vector<16x32xbf16>
    %c0_1 = arith.constant 0 : index
    %c0_2 = arith.constant 0 : index
    %1 = vector.load %arg2[%c0_1, %c0_2] : memref<8x32xbf16, #tpu.memory_space<vmem>>, vector<8x32xbf16>
    %c0_3 = arith.constant 0 : index
    %c0_4 = arith.constant 0 : index
    %2 = vector.load %arg3[%c0_3, %c0_4] : memref<64x8xbf16, #tpu.memory_space<vmem>>, vector<64x8xbf16>
    %cst = arith.constant dense<0.000000e+00> : vector<16x8xf32>
    %3 = tpu.matmul %0, %1, %cst {dimension_numbers = #tpu.dot_dimension_numbers<[1], [1], [0], [0], [0, 0, 1, 0], [], []>} : vector<16x32xbf16>, vector<8x32xbf16>, vector<16x8xf32> -> vector<16x8xf32>
    %4 = arith.truncf %3 : vector<16x8xf32> to vector<16x8xbf16>
    %cst_5 = arith.constant dense<0.000000e+00> : vector<16x64xf32>
    %5 = tpu.matmul %4, %2, %cst_5 {dimension_numbers = #tpu.dot_dimension_numbers<[1], [1], [0], [0], [0, 0, 1, 0], [], []>} : vector<16x8xbf16>, vector<64x8xbf16>, vector<16x64xf32> -> vector<16x64xf32>
    %c0_6 = arith.constant 0 : index
    %c0_7 = arith.constant 0 : index
    %6 = vector.load %arg4[%c0_6, %c0_7] : memref<16x64xf32, #tpu.memory_space<vmem>>, vector<16x64xf32>
    tpu.vector_store %arg4[%c0_6, %c0_7], %5 {strides = array<i32>} : memref<16x64xf32, #tpu.memory_space<vmem>>, vector<16x64xf32>,
    return
  }
  func.func @transform_0(%arg0: i32) -> (i32, i32) {
    %c0_i32 = arith.constant 0 : i32
    %c0_i32_0 = arith.constant 0 : i32
    return %arg0, %c0_i32 : i32, i32
  }
  func.func @transform_1(%arg0: i32) -> (i32, i32) {
    %c0_i32 = arith.constant 0 : i32
    %c0_i32_0 = arith.constant 0 : i32
    %c0_i32_1 = arith.constant 0 : i32
    return %c0_i32, %c0_i32_0 : i32, i32
  }
  func.func @transform_2(%arg0: i32) -> (i32, i32) {
    %c0_i32 = arith.constant 0 : i32
    %c0_i32_0 = arith.constant 0 : i32
    %c0_i32_1 = arith.constant 0 : i32
    return %c0_i32, %c0_i32_0 : i32, i32
  }
  func.func @transform_3(%arg0: i32) -> (i32, i32) {
    %c0_i32 = arith.constant 0 : i32
    %c0_i32_0 = arith.constant 0 : i32
    return %arg0, %c0_i32 : i32, i32
  }
}

</mosaic_0001>

<llo_original>
// kernel: tpu_custom_call.1
$region0: #{tpu_custom_call.1}
  #allocation0 [shape = 'u32[]', space=smem, size = 0x4, offset = 0x4, fixed_abs, tag = 'smem constant byte address 0x4 - core index']
  #allocation1 [shape = 'u32[144,128]{1,0:T(1,128)}', space=vmem, size = 0x12000, scoped, tag = 'internal scratch']
  %s0 = inlined_call_operand.vmem [shape: bf16[16,32], index: 0, kind: input, shape index: {}]
  %s1 = inlined_call_operand.vmem [shape: bf16[8,32], index: 1, kind: input, shape index: {}]
  %s2 = inlined_call_operand.vmem [shape: bf16[64,8], index: 2, kind: input, shape index: {}]
  %s3 = inlined_call_operand.hbm [shape: f32[16,64], index: 3, kind: output, shape index: {}]
  %s4 = sld [smem:[#allocation0]]
  $region22: #{tpu_custom_call.1} parent=0
    _
  %s6 = ssub.s32 1, %s4
  %s7 = scalar_select 0, %s6, %s4
  $region1: #{tpu_custom_call.1} parent=0
    #allocation2 [shape = 'u8[8192]{0}', space=vmem, size = 0x2000, scoped, tag = 'output window, operand 0, single buffered']
    #allocation3 [shape = 's32[1]{0}', space=sflag, size = 0x4, scoped, tag = 'scoped memory for tpu_custom_call.1']
    %8 = vsyncpa [#allocation3], 0
    // Predicated region
    $region2: #{tpu_custom_call.1} parent=1 // pred_check
      _
    $region3: #{tpu_custom_call.1} parent=1 // pred_check_branch
      %10 = sbr.rel (0) target = $region5
    $region4: #{tpu_custom_call.1} parent=1 // pred_region
      _
    $region5: #{tpu_custom_call.1} parent=1 // pred_fallthru
      _
    // Predicated region
    $region6: #{tpu_custom_call.1} parent=1 // pred_check
      _
    $region7: #{tpu_custom_call.1} parent=1 // pred_check_branch
      %12 = sbr.rel (0) target = $region9
    $region8: #{tpu_custom_call.1} parent=1 // pred_region
      _
    $region9: #{tpu_custom_call.1} parent=1 // pred_fallthru
      _
    // Predicated region
    $region10: #{tpu_custom_call.1} parent=1 // pred_check
      _
    $region11: #{tpu_custom_call.1} parent=1 // pred_check_branch
      %14 = sbr.rel (0) target = $region13
    $region12: #{tpu_custom_call.1} parent=1 // pred_region
      _
    $region13: #{tpu_custom_call.1} parent=1 // pred_fallthru
      _
    %v16 = vld [vmem:[%s0] sm:$0xf]
    %v17 = vld [vmem:[%s0 + $0x4] sm:$0xf]
    %v18 = vld [vmem:[%s1] sm:$0xf]
    %v19 = vld [vmem:[%s2] sm:$0xf]
    %v20 = vld [vmem:[%s2 + $0x4] sm:$0xf]
    %v21 = vld [vmem:[%s2 + $0x8] sm:$0xf]
    %v22 = vld [vmem:[%s2 + $0xc] sm:$0xf]
    %v23 = vld [vmem:[%s2 + $0x10] sm:$0xf]
    %v24 = vld [vmem:[%s2 + $0x14] sm:$0xf]
    %v25 = vld [vmem:[%s2 + $0x18] sm:$0xf]
    %v26 = vld [vmem:[%s2 + $0x1c] sm:$0xf]
    %v29 = vunpack.c.l.b16 %v16
    %v30 = vunpack.c.l.b16 %v17
    %v31 = vpack.c.b16 %v30, %v29
    %vm32 = vcmask 261120
    %v34 = vsel %vm32, %v31, 0
    %v37 = vsel %vm32, %v18, 0
    %39 = vmatprep.subr.bf16.mxu0 0
    %40 = vmatpush1.bf16.xpose.msra.mxu0 0
    %41 = vmatprep.subr.bf16.mxu0 0
    %42 = vmatpush1.bf16.xpose.msra.mxu0 0
    %43 = vmatprep.subr.bf16.mxu0 0
    %44 = vmatpush1.bf16.xpose.msra.mxu0 0
    %45 = vmatprep.subr.bf16.mxu0 0
    %46 = vmatpush1.bf16.xpose.msra.mxu0 0
    %47 = vmatprep.subr.bf16.mxu0 0
    %48 = vmatpush1.bf16.xpose.msra.mxu0 0
    %49 = vmatprep.subr.bf16.mxu0 0
    %50 = vmatpush1.bf16.xpose.msra.mxu0 0
    %51 = vmatprep.subr.bf16.mxu0 0
    %52 = vmatpush1.bf16.xpose.msra.mxu0 0
    %53 = vmatprep.subr.bf16.mxu0 0
    %54 = vmatpush1.bf16.xpose.msra.mxu0 %v37
    %55 = vmatprep.subr.bf16.mxu0 0
    %56 = vmatpush2.bf16.xpose.msra.mxu0 0
    %57 = vmatprep.subr.bf16.mxu0 0
    %58 = vmatpush2.bf16.xpose.msra.mxu0 0
    %59 = vmatprep.subr.bf16.mxu0 0
    %60 = vmatpush2.bf16.xpose.msra.mxu0 0
    %61 = vmatprep.subr.bf16.mxu0 0
    %62 = vmatpush2.bf16.xpose.msra.mxu0 0
    %63 = vmatprep.subr.bf16.mxu0 0
    %64 = vmatpush2.bf16.xpose.msra.mxu0 0
    %65 = vmatprep.subr.bf16.mxu0 0
    %66 = vmatpush2.bf16.xpose.msra.mxu0 0
    %67 = vmatprep.subr.bf16.mxu0 0
    %68 = vmatpush2.bf16.xpose.msra.mxu0 0
    %69 = vmatprep.subr.bf16.mxu0 0
    %70 = vmatpush2.bf16.xpose.msra.mxu0 0
    %71 = vmatprep.mubr.bf16.mxu0 0
    %72 = vmatmul.mubr.bf16.gmra.mxu0 %v34
    %v73 = vpop.f32.mrf.mxu0
    %v74 = vadd.f32 0.0, %v73
    %v75 = vpop.f32.mrf.mxu0
    %v76 = vpop.f32.mrf.mxu0
    %v77 = vadd.f32 0.0, %v76
    %v78 = vpop.f32.mrf.mxu0
    %79 = vdwg.mxu0
    %v80 = vpack.c.bf16 %v77, %v74
    %v89 = vunpack.c.l.b16 %v19
    %v90 = vunpack.c.l.b16 %v20
    %v91 = vunpack.c.l.b16 %v21
    %v92 = vunpack.c.l.b16 %v22
    %v93 = vunpack.c.l.b16 %v23
    %v94 = vunpack.c.l.b16 %v24
    %v95 = vunpack.c.l.b16 %v25
    %v96 = vunpack.c.l.b16 %v26
    %v97 = vpack.c.b16 %v90, %v89
    %v98 = vpack.c.b16 %v92, %v91
    %v99 = vpack.c.b16 %v94, %v93
    %v100 = vpack.c.b16 %v96, %v95
    %vm101 = vcmask 64512
    %v103 = vsel %vm101, %v80, 0
    %v106 = vsel %vm101, %v97, 0
    %v109 = vsel %vm101, %v98, 0
    %v112 = vsel %vm101, %v99, 0
    %v115 = vsel %vm101, %v100, 0
    %117 = vmatprep.subr.bf16.mxu0 0
    %118 = vmatpush1.bf16.xpose.msra.mxu0 0
    %119 = vmatprep.subr.bf16.mxu0 0
    %120 = vmatpush1.bf16.xpose.msra.mxu0 0
    %121 = vmatprep.subr.bf16.mxu0 0
    %122 = vmatpush1.bf16.xpose.msra.mxu0 0
    %123 = vmatprep.subr.bf16.mxu0 0
    %124 = vmatpush1.bf16.xpose.msra.mxu0 0
    %125 = vmatprep.subr.bf16.mxu0 0
    %126 = vmatpush1.bf16.xpose.msra.mxu0 %v115
    %127 = vmatprep.subr.bf16.mxu0 0
    %128 = vmatpush1.bf16.xpose.msra.mxu0 %v112
    %129 = vmatprep.subr.bf16.mxu0 0
    %130 = vmatpush1.bf16.xpose.msra.mxu0 %v109
    %131 = vmatprep.subr.bf16.mxu0 0
    %132 = vmatpush1.bf16.xpose.msra.mxu0 %v106
    %133 = vmatprep.subr.bf16.mxu0 0
    %134 = vmatpush2.bf16.xpose.msra.mxu0 0
    %135 = vmatprep.subr.bf16.mxu0 0
    %136 = vmatpush2.bf16.xpose.msra.mxu0 0
    %137 = vmatprep.subr.bf16.mxu0 0
    %138 = vmatpush2.bf16.xpose.msra.mxu0 0
    %139 = vmatprep.subr.bf16.mxu0 0
    %140 = vmatpush2.bf16.xpose.msra.mxu0 0
    %141 = vmatprep.subr.bf16.mxu0 0
    %142 = vmatpush2.bf16.xpose.msra.mxu0 0
    %143 = vmatprep.subr.bf16.mxu0 0
    %144 = vmatpush2.bf16.xpose.msra.mxu0 0
    %145 = vmatprep.subr.bf16.mxu0 0
    %146 = vmatpush2.bf16.xpose.msra.mxu0 0
    %147 = vmatprep.subr.bf16.mxu0 0
    %148 = vmatpush2.bf16.xpose.msra.mxu0 0
    %149 = vmatprep.mubr.bf16.mxu0 0
    %150 = vmatmul.mubr.bf16.gmra.mxu0 %v103
    %v151 = vpop.f32.mrf.mxu0
    %v152 = vadd.f32 0.0, %v151
    %v153 = vpop.f32.mrf.mxu0
    %v154 = vpop.f32.mrf.mxu0
    %v155 = vadd.f32 0.0, %v154
    %v156 = vpop.f32.mrf.mxu0
    %157 = vdwg.mxu0
    %vm158 = vcmask 523264
    %159 = vst.msk [vmem:[#allocation2] sm:$0xff] %vm158, %v152
    %160 = vst.msk [vmem:[#allocation2 + $0x8] sm:$0xff] %vm158, %v155
    // Predicated region
    $region14: #{tpu_custom_call.1} parent=1 // pred_check
      _
    $region15: #{tpu_custom_call.1} parent=1 // pred_check_branch
      %162 = sbr.rel (0) target = $region17
    $region16: #{tpu_custom_call.1} parent=1 // pred_region
      %s164 = ssub.s32 256, 256
      %165 = vsyncadd [#allocation3], %s164
      %s166 = sshll.u32 [#allocation2], 4
      %s167 = int_to_ptr.vmem [resolvable:$true] %s166
      %172 = dma.vmem_to_hbm [thread:$0]  %s167, 256, %s3, [#allocation3], 128, 128, 8
    $region17: #{tpu_custom_call.1} parent=1 // pred_fallthru
      _
    // Predicated region
    $region18: #{tpu_custom_call.1} parent=1 // pred_check
      _
    $region19: #{tpu_custom_call.1} parent=1 // pred_check_branch
      %174 = sbr.rel (0) target = $region21
    $region20: #{tpu_custom_call.1} parent=1 // pred_region
      %175 = dma.done [#allocation3], 256
    $region21: #{tpu_custom_call.1} parent=1 // pred_fallthru
      _
    %176 = vsyncpa [#allocation3], 1

</llo_original>
